<compile_context>
chip_gen: v7x
topology: tpu7x:2x2x1
jax: 0.10.0
libtpu: 0.0.40
codegen_flags: <defaults>
</compile_context>

<pallas_src>
import functools
import numpy as np
import jax
import jax.numpy as jnp
from jax.experimental import pallas as pl
from jax.experimental.pallas import tpu as pltpu

_LANE = 128
_SUBLANE = 8
_MAX_ROW_TILE = 1024                    # big tiles amortize ~0.35 us/step; fits all gens
_TILE_VMEM_BUDGET = 24 * 1024 * 1024    # conservative vs v7x (64 MiB phys / 32 MiB scoped)
_VMEM_LIMIT_CAP = 48 * 1024 * 1024


def _round_up(x, m):
    return (x + m - 1) // m * m


def _cdiv(a, b):
    return (a + b - 1) // b


# ----------------------------- Pallas kernels ------------------------------

def _sc_linear_add_kernel(old_ref, w_ref, new_ref, out_ref):
    # out = old @ W + new. f32 accumulate on the MXU (HIGHEST precision is free:
    # the kernel is HBM-bound), cast to the output dtype only on the store.
    acc = jnp.dot(old_ref[...].astype(jnp.float32), w_ref[...],
                  preferred_element_type=jnp.float32,
                  precision=jax.lax.Precision.HIGHEST)
    out_ref[...] = (acc + new_ref[...].astype(jnp.float32)).astype(out_ref.dtype)


def _add_kernel(old_ref, new_ref, out_ref):
    # irreps_in == irreps_out -> sc is None -> plain residual add.
    out_ref[...] = (old_ref[...].astype(jnp.float32)
                    + new_ref[...].astype(jnp.float32)).astype(out_ref.dtype)


# --------------------------- tiling / VMEM sizing ---------------------------

def _pick_row_tile(n_rows, dim_in, dim_out, in_b, new_b, out_b, w_vmem_bytes):
    """Row tile sized from the actual VMEM footprint (buffers are lane/sublane
    padded inside VMEM even when the HBM arrays are narrow), capped at
    _MAX_ROW_TILE, and clamped so large problems get >= 2 grid steps (v7x
    megacore sharding of the 'parallel' row axis)."""
    dip = _round_up(dim_in, _LANE)
    dop = _round_up(dim_out, _LANE)
    per_row = dip * in_b + dop * new_b + dop * out_b
    budget = max(_TILE_VMEM_BUDGET - 2 * w_vmem_bytes, 1 << 20)
    cap = budget // (2 * per_row)                     # double-buffered row tiles
    cap = max(16, min(_MAX_ROW_TILE, (cap // 16) * 16))
    if n_rows <= 16:
        # single block whose sublane dim equals the full array dim (always legal)
        return max(n_rows, 1)
    return max(16, min(cap, _round_up(_cdiv(n_rows, 2), 16)))


def _vmem_limit(tn, dim_in, dim_out, in_b, new_b, out_b, w_vmem_bytes):
    dip = _round_up(dim_in, _LANE)
    dop = _round_up(dim_out, _LANE)
    tnp = _round_up(tn, _SUBLANE)
    need = 2 * tnp * (dip * in_b + dop * new_b + dop * out_b) + 2 * w_vmem_bytes
    return int(min(_VMEM_LIMIT_CAP, max(8 * 1024 * 1024, 2 * need)))


# ------------------------------- wrappers -----------------------------------

@functools.partial(jax.jit, static_argnames=("tn", "vmem_limit"))
def _linear_add(old, w, new, *, tn, vmem_limit):
    n, dim_in = old.shape
    dim_out = new.shape[1]
    out_dtype = jnp.result_type(old.dtype, new.dtype)

    cost = pl.CostEstimate(
        flops=2 * n * dim_in * dim_out,
        transcendentals=0,
        bytes_accessed=(old.size * old.dtype.itemsize
                        + w.size * w.dtype.itemsize
                        + new.size * new.dtype.itemsize
                        + n * dim_out * jnp.dtype(out_dtype).itemsize))

    return pl.pallas_call(
        _sc_linear_add_kernel,
        out_shape=jax.ShapeDtypeStruct((n, dim_out), out_dtype),
        grid=(pl.cdiv(n, tn),),
        in_specs=[
            # full (unpadded) last dims: legal because they equal the array dims;
            # avoids the 6-7x HBM byte inflation of 128-lane padding.
            pl.BlockSpec((tn, dim_in), lambda i: (i, 0)),        # old: row-tiled
            pl.BlockSpec((dim_in, dim_out), lambda i: (0, 0)),   # W: VMEM-resident
            pl.BlockSpec((tn, dim_out), lambda i: (i, 0)),       # new: row-tiled
        ],
        out_specs=pl.BlockSpec((tn, dim_out), lambda i: (i, 0)),
        compiler_params=pltpu.CompilerParams(
            dimension_semantics=("parallel",),
            vmem_limit_bytes=vmem_limit),
        cost_estimate=cost,
    )(old, w, new)


@functools.partial(jax.jit, static_argnames=("tn", "vmem_limit"))
def _residual_add(old, new, *, tn, vmem_limit):
    n, d = old.shape
    out_dtype = jnp.result_type(old.dtype, new.dtype)

    cost = pl.CostEstimate(
        flops=n * d,
        transcendentals=0,
        bytes_accessed=(old.size * old.dtype.itemsize
                        + new.size * new.dtype.itemsize
                        + n * d * jnp.dtype(out_dtype).itemsize))

    return pl.pallas_call(
        _add_kernel,
        out_shape=jax.ShapeDtypeStruct((n, d), out_dtype),
        grid=(pl.cdiv(n, tn),),
        in_specs=[pl.BlockSpec((tn, d), lambda i: (i, 0)),
                  pl.BlockSpec((tn, d), lambda i: (i, 0))],
        out_specs=pl.BlockSpec((tn, d), lambda i: (i, 0)),
        compiler_params=pltpu.CompilerParams(
            dimension_semantics=("parallel",),
            vmem_limit_bytes=vmem_limit),
        cost_estimate=cost,
    )(old, new)


# ------------------------------ glue / setup -------------------------------

def _irreps_dim(irreps):
    return sum(mul * (2 * l + 1) for mul, l in irreps)


def _build_block_weight(irreps_in, irreps_out, weights):
    """Assemble the (dim_in, dim_out) matrix equivalent to the e3nn Linear.
    `weights` is {l: (mul_in, mul_out)}. Each l-block is kron(w_l, I_(2l+1)) /
    sqrt(mul_in) (e3nn path normalization, one path per output irrep)."""
    dim_in = _irreps_dim(irreps_in)
    dim_out = _irreps_dim(irreps_out)
    W = np.zeros((dim_in, dim_out), dtype=np.float32)

    in_offsets, off = {}, 0
    for mul, l in irreps_in:
        in_offsets[l] = (off, mul)
        off += mul * (2 * l + 1)
    out_offsets, off = {}, 0
    for mul, l in irreps_out:
        out_offsets[l] = (off, mul)
        off += mul * (2 * l + 1)

    for l, w in weights.items():
        in_off, mul_in = in_offsets[l]
        out_off, mul_out = out_offsets[l]
        ir_dim = 2 * l + 1
        block = np.kron(np.asarray(w, np.float32), np.eye(ir_dim, dtype=np.float32))
        block = block / np.sqrt(mul_in)
        W[in_off:in_off + mul_in * ir_dim, out_off:out_off + mul_out * ir_dim] = block
    return W


class SkipConnection:
    """JAX/Pallas equivalent of dptb SkipConnection (irreps given as (mul, l))."""

    def __init__(self, irreps_in, irreps_out, key):
        self.irreps_in = tuple(irreps_in)
        self.irreps_out = tuple(irreps_out)
        self.dim_in = _irreps_dim(irreps_in)
        self.dim_out = _irreps_dim(irreps_out)

        if self.irreps_in == self.irreps_out:
            self.W = None                               # sc is None -> residual add
        else:
            # deterministic standard-normal weights, one (mul_in, mul_out) per l
            weights = {}
            for (mul_in, l_in) in irreps_in:
                mul_out = None
                for (m_o, l_o) in irreps_out:
                    if l_o == l_in:
                        mul_out = m_o
                        break
                if mul_out is None:
                    continue                            # input irrep not connected
                key, sub = jax.random.split(key)
                weights[l_in] = jax.random.normal(sub, (mul_in, mul_out), jnp.float32)
            W = _build_block_weight(irreps_in, irreps_out, weights)
            self.W = jnp.asarray(W, jnp.float32)        # unpadded, f32 (precision)
            # NOTE: for very large irreps on v7x, pipeline_mode=pl.Buffered(1) on
            # the constant-index W BlockSpec would halve W's VMEM footprint.

    def __call__(self, old, new):
        n = old.shape[0]
        assert old.shape == (n, self.dim_in)
        assert new.shape == (n, self.dim_out)
        in_b = jnp.dtype(old.dtype).itemsize
        new_b = jnp.dtype(new.dtype).itemsize
        out_b = jnp.dtype(jnp.result_type(old.dtype, new.dtype)).itemsize

        if self.W is None:
            d = self.dim_in
            tn = _pick_row_tile(n, d, d, in_b, new_b, out_b, 0)
            vl = _vmem_limit(tn, d, d, in_b, new_b, out_b, 0)
            return _residual_add(old, new, tn=tn, vmem_limit=vl)

        w_vmem = _round_up(self.dim_in, _SUBLANE) * _round_up(self.dim_out, _LANE) * 4
        tn = _pick_row_tile(n, self.dim_in, self.dim_out, in_b, new_b, out_b, w_vmem)
        vl = _vmem_limit(tn, self.dim_in, self.dim_out, in_b, new_b, out_b, w_vmem)
        return _linear_add(old, self.W, new, tn=tn, vmem_limit=vl)


# --------------------------------- demo ------------------------------------

if __name__ == "__main__":
    key = jax.random.PRNGKey(0)

    # irreps_in  = 8x0e + 4x1o  (dim 8 + 12 = 20)
    # irreps_out = 6x0e + 4x1o  (dim 6 + 12 = 18)  -> the Linear(sc) path runs
    irreps_in = [(8, 0), (4, 1)]
    irreps_out = [(6, 0), (4, 1)]

    k_mod, k_old, k_new, k_old2, k_new2 = jax.random.split(key, 5)
    module = SkipConnection(irreps_in, irreps_out, k_mod)

    N = 16
    old = jax.random.normal(k_old, (N, _irreps_dim(irreps_in)), jnp.float32)
    new = jax.random.normal(k_new, (N, _irreps_dim(irreps_out)), jnp.float32)

    out = jax.block_until_ready(module(old, new))

    # host reference in f64 (kernel runs f32 HIGHEST-precision matmul)
    ref = (np.asarray(old, np.float64) @ np.asarray(module.W, np.float64)
           + np.asarray(new, np.float64))
    assert out.shape == ref.shape
    assert np.allclose(np.asarray(out, np.float64), ref, atol=1e-4, rtol=1e-4)

    # identity-irreps case: sc is None -> plain tiled residual-add kernel
    module_id = SkipConnection(irreps_in, irreps_in, k_mod)
    old2 = jax.random.normal(k_old2, (N, _irreps_dim(irreps_in)), jnp.float32)
    new2 = jax.random.normal(k_new2, (N, _irreps_dim(irreps_in)), jnp.float32)
    out2 = jax.block_until_ready(module_id(old2, new2))
    assert jnp.allclose(out2, old2 + new2, atol=1e-6)

    print("KERNEL_OK")
</pallas_src>

<mosaic_0001>
module attributes {stable_mosaic.version = 11 : i64} {
  func.func @_sc_linear_add_kernel(%arg0: i32, %arg1: memref<16x20xf32, #tpu.memory_space<vmem>>, %arg2: memref<20x18xf32, #tpu.memory_space<vmem>>, %arg3: memref<16x18xf32, #tpu.memory_space<vmem>>, %arg4: memref<16x18xf32, #tpu.memory_space<vmem>>) attributes {dimension_semantics = [#tpu.dimension_semantics<parallel>], iteration_bounds = array<i64: 1>, scalar_prefetch = 0 : i64, scratch_operands = 0 : i64, tpu.core_type = #tpu.core_type<tc>, window_params = [{transform_indices = @transform_0, window_bounds = array<i64: 16, 20>}, {pipeline_mode = #tpu.pipeline_mode<synchronous>, transform_indices = @transform_1, window_bounds = array<i64: 20, 18>}, {transform_indices = @transform_2, window_bounds = array<i64: 16, 18>}, {transform_indices = @transform_3, window_bounds = array<i64: 16, 18>}]} {
    %c0 = arith.constant 0 : index
    %c0_0 = arith.constant 0 : index
    %0 = vector.load %arg1[%c0, %c0_0] : memref<16x20xf32, #tpu.memory_space<vmem>>, vector<16x20xf32>
    %c0_1 = arith.constant 0 : index
    %c0_2 = arith.constant 0 : index
    %1 = vector.load %arg2[%c0_1, %c0_2] : memref<20x18xf32, #tpu.memory_space<vmem>>, vector<20x18xf32>
    %cst = arith.constant dense<0.000000e+00> : vector<16x18xf32>
    %2 = tpu.matmul %0, %1, %cst {dimension_numbers = #tpu.dot_dimension_numbers<[1], [0], [0], [1], [0, 0, 1, 1], [], []>, precision = #tpu.contract_precision<fp32>} : vector<16x20xf32>, vector<20x18xf32>, vector<16x18xf32> -> vector<16x18xf32>
    %c0_3 = arith.constant 0 : index
    %c0_4 = arith.constant 0 : index
    %3 = vector.load %arg3[%c0_3, %c0_4] : memref<16x18xf32, #tpu.memory_space<vmem>>, vector<16x18xf32>
    %4 = arith.addf %2, %3 : vector<16x18xf32>
    %c0_5 = arith.constant 0 : index
    %c0_6 = arith.constant 0 : index
    %5 = vector.load %arg4[%c0_5, %c0_6] : memref<16x18xf32, #tpu.memory_space<vmem>>, vector<16x18xf32>
    tpu.vector_store %arg4[%c0_5, %c0_6], %4 {strides = array<i32>} : memref<16x18xf32, #tpu.memory_space<vmem>>, vector<16x18xf32>,
    return
  }
  func.func @transform_0(%arg0: i32) -> (i32, i32) {
    %c0_i32 = arith.constant 0 : i32
    %c0_i32_0 = arith.constant 0 : i32
    return %arg0, %c0_i32 : i32, i32
  }
  func.func @transform_1(%arg0: i32) -> (i32, i32) {
    %c0_i32 = arith.constant 0 : i32
    %c0_i32_0 = arith.constant 0 : i32
    %c0_i32_1 = arith.constant 0 : i32
    return %c0_i32, %c0_i32_0 : i32, i32
  }
  func.func @transform_2(%arg0: i32) -> (i32, i32) {
    %c0_i32 = arith.constant 0 : i32
    %c0_i32_0 = arith.constant 0 : i32
    return %arg0, %c0_i32 : i32, i32
  }
  func.func @transform_3(%arg0: i32) -> (i32, i32) {
    %c0_i32 = arith.constant 0 : i32
    %c0_i32_0 = arith.constant 0 : i32
    return %arg0, %c0_i32 : i32, i32
  }
}

</mosaic_0001>

<llo_original>
// kernel: _linear_add.1
$region0: #{_linear_add.1}
  #allocation0 [shape = 'u32[]', space=smem, size = 0x4, offset = 0x4, fixed_abs, tag = 'smem constant byte address 0x4 - core index']
  #allocation1 [shape = 'u32[144,128]{1,0:T(1,128)}', space=vmem, size = 0x12000, scoped, tag = 'internal scratch']
  %s0 = inlined_call_operand.hbm [shape: f32[16,20], index: 0, kind: input, shape index: {}]
  %s1 = inlined_call_operand.hbm [shape: f32[20,18], index: 1, kind: input, shape index: {}]
  %s2 = inlined_call_operand.hbm [shape: f32[16,18], index: 2, kind: input, shape index: {}]
  %s3 = inlined_call_operand.hbm [shape: f32[16,18], index: 3, kind: output, shape index: {}]
  %s4 = sld [smem:[#allocation0]]
  $region34: #{_linear_add.1} parent=0
    _
  %s6 = ssub.s32 1, %s4
  %s7 = scalar_select 0, %s6, %s4
  $region1: #{_linear_add.1} parent=0
    #allocation2 [shape = 'u8[8192]{0}', space=vmem, size = 0x2000, scoped, tag = 'input window, operand 0, single buffered']
    #allocation3 [shape = 's32[1]{0}', space=sflag, size = 0x4, scoped, tag = 'scoped memory for _linear_add.1']
    #allocation4 [shape = 's32[1]{0}', space=sflag, size = 0x4, scoped, tag = 'scoped memory for _linear_add.1']
    #allocation5 [shape = 'u8[12288]{0}', space=vmem, size = 0x3000, scoped, tag = 'input window, operand 1, single buffered']
    #allocation6 [shape = 's32[1]{0}', space=sflag, size = 0x4, scoped, tag = 'scoped memory for _linear_add.1']
    #allocation7 [shape = 'u8[8192]{0}', space=vmem, size = 0x2000, scoped, tag = 'input window, operand 2, single buffered']
    #allocation8 [shape = 'u8[8192]{0}', space=vmem, size = 0x2000, scoped, tag = 'output window, operand 0, single buffered']
    %8 = vsyncpa [#allocation3], 0
    %9 = vsyncpa [#allocation6], 0
    %10 = vsyncpa [#allocation4], 0
    // Predicated region
    $region2: #{_linear_add.1} parent=1 // pred_check
      _
    $region3: #{_linear_add.1} parent=1 // pred_check_branch
      %12 = sbr.rel (0) target = $region5
    $region4: #{_linear_add.1} parent=1 // pred_region
      %s14 = ssub.s32 256, 256
      %15 = vsyncadd [#allocation3], %s14
      %s16 = sshll.u32 [#allocation2], 4
      %s17 = int_to_ptr.vmem [resolvable:$true] %s16
      %22 = dma.hbm_to_vmem [thread:$0]  %s0, 256, %s17, [#allocation3], 128, 128, 8
    $region5: #{_linear_add.1} parent=1 // pred_fallthru
      _
    // Predicated region
    $region6: #{_linear_add.1} parent=1 // pred_check
      _
    $region7: #{_linear_add.1} parent=1 // pred_check_branch
      %24 = sbr.rel (0) target = $region9
    $region8: #{_linear_add.1} parent=1 // pred_region
      %s26 = ssub.s32 384, 384
      %27 = vsyncadd [#allocation6], %s26
      %s28 = sshll.u32 [#allocation5], 4
      %s29 = int_to_ptr.vmem [resolvable:$true] %s28
      %34 = dma.hbm_to_vmem [thread:$0]  %s1, 384, %s29, [#allocation6], 128, 128, 8
    $region9: #{_linear_add.1} parent=1 // pred_fallthru
      _
    // Predicated region
    $region10: #{_linear_add.1} parent=1 // pred_check
      _
    $region11: #{_linear_add.1} parent=1 // pred_check_branch
      %36 = sbr.rel (0) target = $region13
    $region12: #{_linear_add.1} parent=1 // pred_region
      %s38 = ssub.s32 256, 256
      %39 = vsyncadd [#allocation6], %s38
      %s40 = sshll.u32 [#allocation7], 4
      %s41 = int_to_ptr.vmem [resolvable:$true] %s40
      %46 = dma.hbm_to_vmem [thread:$0]  %s2, 256, %s41, [#allocation6], 128, 128, 8
    $region13: #{_linear_add.1} parent=1 // pred_fallthru
      _
    // Predicated region
    $region14: #{_linear_add.1} parent=1 // pred_check
      _
    $region15: #{_linear_add.1} parent=1 // pred_check_branch
      %48 = sbr.rel (0) target = $region17
    $region16: #{_linear_add.1} parent=1 // pred_region
      %49 = dma.done [#allocation3], 256
    $region17: #{_linear_add.1} parent=1 // pred_fallthru
      _
    // Predicated region
    $region18: #{_linear_add.1} parent=1 // pred_check
      _
    $region19: #{_linear_add.1} parent=1 // pred_check_branch
      %51 = sbr.rel (0) target = $region21
    $region20: #{_linear_add.1} parent=1 // pred_region
      %52 = dma.done [#allocation6], 384
    $region21: #{_linear_add.1} parent=1 // pred_fallthru
      _
    // Predicated region
    $region22: #{_linear_add.1} parent=1 // pred_check
      _
    $region23: #{_linear_add.1} parent=1 // pred_check_branch
      %54 = sbr.rel (0) target = $region25
    $region24: #{_linear_add.1} parent=1 // pred_region
      %55 = dma.done [#allocation6], 256
    $region25: #{_linear_add.1} parent=1 // pred_fallthru
      _
    %v56 = vld [vmem:[#allocation2] sm:$0xff]
    %v57 = vld [vmem:[#allocation2 + $0x8] sm:$0xff]
    %v58 = vld [vmem:[#allocation5] sm:$0xff]
    %v59 = vld [vmem:[#allocation5 + $0x8] sm:$0xff]
    %v60 = vld [vmem:[#allocation5 + $0x10] sm:$0xf]
    %v61 = vld [vmem:[#allocation7] sm:$0xff]
    %v62 = vld [vmem:[#allocation7 + $0x8] sm:$0xff]
    %vm63 = vcmask 162816
    %v65 = vsel %vm63, %v56, 0
    %v68 = vsel %vm63, %v57, 0
    %vm70 = vcmask 1043456
    %v72 = vsel %vm70, %v60, 0
    %74 = vmatprep.subr.mxu0 0.0
    %v75 = vand.u32 %v58, 4294901760
    %76 = vmatpush1.msra.mxu0 %v75
    %77 = vmatprep.subr.mxu0 0.0
    %v78 = vand.u32 %v59, 4294901760
    %79 = vmatpush1.msra.mxu0 %v78
    %80 = vmatprep.subr.mxu0 0.0
    %v81 = vand.u32 %v72, 4294901760
    %82 = vmatpush1.msra.mxu0 %v81
    %83 = vmatprep.subr.mxu0 0.0
    %84 = vmatpush1.msra.mxu0 0.0
    %85 = vmatprep.subr.mxu0 0.0
    %86 = vmatpush1.msra.mxu0 0.0
    %87 = vmatprep.subr.mxu0 0.0
    %88 = vmatpush1.msra.mxu0 0.0
    %89 = vmatprep.subr.mxu0 0.0
    %90 = vmatpush1.msra.mxu0 0.0
    %91 = vmatprep.subr.mxu0 0.0
    %92 = vmatpush1.msra.mxu0 0.0
    %93 = vmatprep.subr.mxu0 0.0
    %94 = vmatpush1.msra.mxu0 0.0
    %95 = vmatprep.subr.mxu0 0.0
    %96 = vmatpush1.msra.mxu0 0.0
    %97 = vmatprep.subr.mxu0 0.0
    %98 = vmatpush1.msra.mxu0 0.0
    %99 = vmatprep.subr.mxu0 0.0
    %100 = vmatpush1.msra.mxu0 0.0
    %101 = vmatprep.subr.mxu0 0.0
    %102 = vmatpush1.msra.mxu0 0.0
    %103 = vmatprep.subr.mxu0 0.0
    %104 = vmatpush1.msra.mxu0 0.0
    %105 = vmatprep.subr.mxu0 0.0
    %106 = vmatpush1.msra.mxu0 0.0
    %107 = vmatprep.subr.mxu0 0.0
    %108 = vmatpush1.msra.mxu0 0.0
    %109 = vmatprep.subr.mxu0 0.0
    %110 = vmatpush1.msra.mxu0 0.0
    %111 = vmatprep.subr.mxu0 0.0
    %112 = vmatpush1.msra.mxu0 0.0
    %113 = vmatprep.subr.mxu0 0.0
    %114 = vmatpush1.msra.mxu0 0.0
    %115 = vmatprep.subr.mxu0 0.0
    %116 = vmatpush1.msra.mxu0 0.0
    %117 = vmatprep.subr.mxu0 0.0
    %118 = vmatpush1.msra.mxu0 0.0
    %119 = vmatprep.subr.mxu0 0.0
    %120 = vmatpush1.msra.mxu0 0.0
    %121 = vmatprep.subr.mxu0 0.0
    %122 = vmatpush1.msra.mxu0 0.0
    %123 = vmatprep.subr.mxu0 0.0
    %124 = vmatpush1.msra.mxu0 0.0
    %125 = vmatprep.subr.mxu0 0.0
    %126 = vmatpush1.msra.mxu0 0.0
    %127 = vmatprep.subr.mxu0 0.0
    %128 = vmatpush1.msra.mxu0 0.0
    %129 = vmatprep.subr.mxu0 0.0
    %130 = vmatpush1.msra.mxu0 0.0
    %131 = vmatprep.subr.mxu0 0.0
    %132 = vmatpush1.msra.mxu0 0.0
    %133 = vmatprep.subr.mxu0 0.0
    %134 = vmatpush1.msra.mxu0 0.0
    %135 = vmatprep.subr.mxu0 0.0
    %136 = vmatpush1.msra.mxu0 0.0
    %137 = vmatprep.subr.mxu0 0.0
    %138 = vmatpush1.msra.mxu0 0.0
    %139 = vmatprep.subr.mxu0 0.0
    %140 = vmatpush1.msra.mxu0 0.0
    %141 = vmatprep.mubr.f32.mxu0 0.0
    %v142 = vand.u32 %v65, 4294901760
    %v143 = vsub.f32 %v65, %v142
    %v144 = vand.u32 %v143, 4294901760
    %v145 = vsub.f32 %v143, %v144
    %v146 = vand.u32 %v145, 4294901760
    %147 = vmatmul.mubr.f32.gmra.mrb[0].mxu0 %v146
    %v148 = vpop.f32.mrb[0].mxu0
    %v149 = vadd.f32 %v61, %v148
    %v150 = vpop.f32.mrb[0].mxu0
    %151 = vmatprep.mubr.f32.mxu0 0.0
    %v152 = vand.u32 %v68, 4294901760
    %v153 = vsub.f32 %v68, %v152
    %v154 = vand.u32 %v153, 4294901760
    %v155 = vsub.f32 %v153, %v154
    %v156 = vand.u32 %v155, 4294901760
    %157 = vmatmul.mubr.f32.gmra.mrb[0].mxu0 %v156
    %v158 = vpop.f32.mrb[0].mxu0
    %v159 = vadd.f32 %v62, %v158
    %v160 = vpop.f32.mrb[0].mxu0
    %161 = vdwg.mxu0
    %162 = vmatprep.subr.mxu0 0.0
    %v163 = vand.u32 %v58, 4294901760
    %v164 = vsub.f32 %v58, %v163
    %v165 = vand.u32 %v164, 4294901760
    %v166 = vsub.f32 %v164, %v165
    %v167 = vand.u32 %v166, 4294901760
    %168 = vmatpush1.msra.mxu0 %v167
    %169 = vmatprep.subr.mxu0 0.0
    %v170 = vand.u32 %v59, 4294901760
    %v171 = vsub.f32 %v59, %v170
    %v172 = vand.u32 %v171, 4294901760
    %v173 = vsub.f32 %v171, %v172
    %v174 = vand.u32 %v173, 4294901760
    %175 = vmatpush1.msra.mxu0 %v174
    %176 = vmatprep.subr.mxu0 0.0
    %v177 = vand.u32 %v72, 4294901760
    %v178 = vsub.f32 %v72, %v177
    %v179 = vand.u32 %v178, 4294901760
    %v180 = vsub.f32 %v178, %v179
    %v181 = vand.u32 %v180, 4294901760
    %182 = vmatpush1.msra.mxu0 %v181
    %183 = vmatprep.subr.mxu0 0.0
    %184 = vmatpush1.msra.mxu0 0.0
    %185 = vmatprep.subr.mxu0 0.0
    %186 = vmatpush1.msra.mxu0 0.0
    %187 = vmatprep.subr.mxu0 0.0
    %188 = vmatpush1.msra.mxu0 0.0
    %189 = vmatprep.subr.mxu0 0.0
    %190 = vmatpush1.msra.mxu0 0.0
    %191 = vmatprep.subr.mxu0 0.0
    %192 = vmatpush1.msra.mxu0 0.0
    %193 = vmatprep.subr.mxu0 0.0
    %194 = vmatpush1.msra.mxu0 0.0
    %195 = vmatprep.subr.mxu0 0.0
    %196 = vmatpush1.msra.mxu0 0.0
    %197 = vmatprep.subr.mxu0 0.0
    %198 = vmatpush1.msra.mxu0 0.0
    %199 = vmatprep.subr.mxu0 0.0
    %200 = vmatpush1.msra.mxu0 0.0
    %201 = vmatprep.subr.mxu0 0.0
    %202 = vmatpush1.msra.mxu0 0.0
    %203 = vmatprep.subr.mxu0 0.0
    %204 = vmatpush1.msra.mxu0 0.0
    %205 = vmatprep.subr.mxu0 0.0
    %206 = vmatpush1.msra.mxu0 0.0
    %207 = vmatprep.subr.mxu0 0.0
    %208 = vmatpush1.msra.mxu0 0.0
    %209 = vmatprep.subr.mxu0 0.0
    %210 = vmatpush1.msra.mxu0 0.0
    %211 = vmatprep.subr.mxu0 0.0
    %212 = vmatpush1.msra.mxu0 0.0
    %213 = vmatprep.subr.mxu0 0.0
    %214 = vmatpush1.msra.mxu0 0.0
    %215 = vmatprep.subr.mxu0 0.0
    %216 = vmatpush1.msra.mxu0 0.0
    %217 = vmatprep.subr.mxu0 0.0
    %218 = vmatpush1.msra.mxu0 0.0
    %219 = vmatprep.subr.mxu0 0.0
    %220 = vmatpush1.msra.mxu0 0.0
    %221 = vmatprep.subr.mxu0 0.0
    %222 = vmatpush1.msra.mxu0 0.0
    %223 = vmatprep.subr.mxu0 0.0
    %224 = vmatpush1.msra.mxu0 0.0
    %225 = vmatprep.subr.mxu0 0.0
    %226 = vmatpush1.msra.mxu0 0.0
    %227 = vmatprep.subr.mxu0 0.0
    %228 = vmatpush1.msra.mxu0 0.0
    %229 = vmatprep.subr.mxu0 0.0
    %230 = vmatpush1.msra.mxu0 0.0
    %231 = vmatprep.subr.mxu0 0.0
    %232 = vmatpush1.msra.mxu0 0.0
    %233 = vmatprep.subr.mxu0 0.0
    %234 = vmatpush1.msra.mxu0 0.0
    %235 = vmatprep.subr.mxu0 0.0
    %236 = vmatpush1.msra.mxu0 0.0
    %237 = vmatprep.subr.mxu0 0.0
    %238 = vmatpush1.msra.mxu0 0.0
    %239 = vmatprep.subr.mxu0 0.0
    %240 = vmatpush1.msra.mxu0 0.0
    %241 = vmatprep.mubr.f32.mxu0 0.0
    %v242 = vand.u32 %v65, 4294901760
    %243 = vmatmul.mubr.f32.gmra.mrb[0].mxu0 %v242
    %v244 = vpop.f32.mrb[0].mxu0
    %v245 = vadd.f32 %v149, %v244
    %v246 = vpop.f32.mrb[0].mxu0
    %247 = vmatprep.mubr.f32.mxu0 0.0
    %v248 = vand.u32 %v68, 4294901760
    %249 = vmatmul.mubr.f32.gmra.mrb[0].mxu0 %v248
    %v250 = vpop.f32.mrb[0].mxu0
    %v251 = vadd.f32 %v159, %v250
    %v252 = vpop.f32.mrb[0].mxu0
    %253 = vdwg.mxu0
    %254 = vmatprep.subr.mxu0 0.0
    %v255 = vand.u32 %v58, 4294901760
    %v256 = vsub.f32 %v58, %v255
    %257 = vmatpush1.msra.mxu0 %v256
    %258 = vmatprep.subr.mxu0 0.0
    %v259 = vand.u32 %v59, 4294901760
    %v260 = vsub.f32 %v59, %v259
    %261 = vmatpush1.msra.mxu0 %v260
    %262 = vmatprep.subr.mxu0 0.0
    %v263 = vand.u32 %v72, 4294901760
    %v264 = vsub.f32 %v72, %v263
    %265 = vmatpush1.msra.mxu0 %v264
    %266 = vmatprep.subr.mxu0 0.0
    %267 = vmatpush1.msra.mxu0 0.0
    %268 = vmatprep.subr.mxu0 0.0
    %269 = vmatpush1.msra.mxu0 0.0
    %270 = vmatprep.subr.mxu0 0.0
    %271 = vmatpush1.msra.mxu0 0.0
    %272 = vmatprep.subr.mxu0 0.0
    %273 = vmatpush1.msra.mxu0 0.0
    %274 = vmatprep.subr.mxu0 0.0
    %275 = vmatpush1.msra.mxu0 0.0
    %276 = vmatprep.subr.mxu0 0.0
    %277 = vmatpush1.msra.mxu0 0.0
    %278 = vmatprep.subr.mxu0 0.0
    %279 = vmatpush1.msra.mxu0 0.0
    %280 = vmatprep.subr.mxu0 0.0
    %281 = vmatpush1.msra.mxu0 0.0
    %282 = vmatprep.subr.mxu0 0.0
    %283 = vmatpush1.msra.mxu0 0.0
    %284 = vmatprep.subr.mxu0 0.0
    %285 = vmatpush1.msra.mxu0 0.0
    %286 = vmatprep.subr.mxu0 0.0
    %287 = vmatpush1.msra.mxu0 0.0
    %288 = vmatprep.subr.mxu0 0.0
    %289 = vmatpush1.msra.mxu0 0.0
    %290 = vmatprep.subr.mxu0 0.0
    %291 = vmatpush1.msra.mxu0 0.0
    %292 = vmatprep.subr.mxu0 0.0
    %293 = vmatpush1.msra.mxu0 0.0
    %294 = vmatprep.subr.mxu0 0.0
    %295 = vmatpush1.msra.mxu0 0.0
    %296 = vmatprep.subr.mxu0 0.0
    %297 = vmatpush1.msra.mxu0 0.0
    %298 = vmatprep.subr.mxu0 0.0
    %299 = vmatpush1.msra.mxu0 0.0
    %300 = vmatprep.subr.mxu0 0.0
    %301 = vmatpush1.msra.mxu0 0.0
    %302 = vmatprep.subr.mxu0 0.0
    %303 = vmatpush1.msra.mxu0 0.0
    %304 = vmatprep.subr.mxu0 0.0
    %305 = vmatpush1.msra.mxu0 0.0
    %306 = vmatprep.subr.mxu0 0.0
    %307 = vmatpush1.msra.mxu0 0.0
    %308 = vmatprep.subr.mxu0 0.0
    %309 = vmatpush1.msra.mxu0 0.0
    %310 = vmatprep.subr.mxu0 0.0
    %311 = vmatpush1.msra.mxu0 0.0
    %312 = vmatprep.subr.mxu0 0.0
    %313 = vmatpush1.msra.mxu0 0.0
    %314 = vmatprep.subr.mxu0 0.0
    %315 = vmatpush1.msra.mxu0 0.0
    %316 = vmatprep.subr.mxu0 0.0
    %317 = vmatpush1.msra.mxu0 0.0
    %318 = vmatprep.subr.mxu0 0.0
    %319 = vmatpush1.msra.mxu0 0.0
    %320 = vmatprep.subr.mxu0 0.0
    %321 = vmatpush1.msra.mxu0 0.0
    %322 = vmatprep.subr.mxu0 0.0
    %323 = vmatpush1.msra.mxu0 0.0
    %324 = vmatprep.mubr.f32.mxu0 0.0
    %v325 = vand.u32 %v65, 4294901760
    %v326 = vsub.f32 %v65, %v325
    %327 = vmatmul.mubr.f32.gmra.mrb[0].mxu0 %v326
    %v328 = vpop.f32.mrb[0].mxu0
    %v329 = vadd.f32 %v245, %v328
    %v330 = vpop.f32.mrb[0].mxu0
    %331 = vmatprep.mubr.f32.mxu0 0.0
    %v332 = vand.u32 %v68, 4294901760
    %v333 = vsub.f32 %v68, %v332
    %334 = vmatmul.mubr.f32.gmra.mrb[0].mxu0 %v333
    %v335 = vpop.f32.mrb[0].mxu0
    %v336 = vadd.f32 %v251, %v335
    %v337 = vpop.f32.mrb[0].mxu0
    %338 = vdwg.mxu0
    %339 = vmatprep.subr.mxu0 0.0
    %v340 = vand.u32 %v58, 4294901760
    %341 = vmatpush1.msra.mxu0 %v340
    %342 = vmatprep.subr.mxu0 0.0
    %v343 = vand.u32 %v59, 4294901760
    %344 = vmatpush1.msra.mxu0 %v343
    %345 = vmatprep.subr.mxu0 0.0
    %v346 = vand.u32 %v72, 4294901760
    %347 = vmatpush1.msra.mxu0 %v346
    %348 = vmatprep.subr.mxu0 0.0
    %349 = vmatpush1.msra.mxu0 0.0
    %350 = vmatprep.subr.mxu0 0.0
    %351 = vmatpush1.msra.mxu0 0.0
    %352 = vmatprep.subr.mxu0 0.0
    %353 = vmatpush1.msra.mxu0 0.0
    %354 = vmatprep.subr.mxu0 0.0
    %355 = vmatpush1.msra.mxu0 0.0
    %356 = vmatprep.subr.mxu0 0.0
    %357 = vmatpush1.msra.mxu0 0.0
    %358 = vmatprep.subr.mxu0 0.0
    %359 = vmatpush1.msra.mxu0 0.0
    %360 = vmatprep.subr.mxu0 0.0
    %361 = vmatpush1.msra.mxu0 0.0
    %362 = vmatprep.subr.mxu0 0.0
    %363 = vmatpush1.msra.mxu0 0.0
    %364 = vmatprep.subr.mxu0 0.0
    %365 = vmatpush1.msra.mxu0 0.0
    %366 = vmatprep.subr.mxu0 0.0
    %367 = vmatpush1.msra.mxu0 0.0
    %368 = vmatprep.subr.mxu0 0.0
    %369 = vmatpush1.msra.mxu0 0.0
    %370 = vmatprep.subr.mxu0 0.0
    %371 = vmatpush1.msra.mxu0 0.0
    %372 = vmatprep.subr.mxu0 0.0
    %373 = vmatpush1.msra.mxu0 0.0
    %374 = vmatprep.subr.mxu0 0.0
    %375 = vmatpush1.msra.mxu0 0.0
    %376 = vmatprep.subr.mxu0 0.0
    %377 = vmatpush1.msra.mxu0 0.0
    %378 = vmatprep.subr.mxu0 0.0
    %379 = vmatpush1.msra.mxu0 0.0
    %380 = vmatprep.subr.mxu0 0.0
    %381 = vmatpush1.msra.mxu0 0.0
    %382 = vmatprep.subr.mxu0 0.0
    %383 = vmatpush1.msra.mxu0 0.0
    %384 = vmatprep.subr.mxu0 0.0
    %385 = vmatpush1.msra.mxu0 0.0
    %386 = vmatprep.subr.mxu0 0.0
    %387 = vmatpush1.msra.mxu0 0.0
    %388 = vmatprep.subr.mxu0 0.0
    %389 = vmatpush1.msra.mxu0 0.0
    %390 = vmatprep.subr.mxu0 0.0
    %391 = vmatpush1.msra.mxu0 0.0
    %392 = vmatprep.subr.mxu0 0.0
    %393 = vmatpush1.msra.mxu0 0.0
    %394 = vmatprep.subr.mxu0 0.0
    %395 = vmatpush1.msra.mxu0 0.0
    %396 = vmatprep.subr.mxu0 0.0
    %397 = vmatpush1.msra.mxu0 0.0
    %398 = vmatprep.subr.mxu0 0.0
    %399 = vmatpush1.msra.mxu0 0.0
    %400 = vmatprep.subr.mxu0 0.0
    %401 = vmatpush1.msra.mxu0 0.0
    %402 = vmatprep.subr.mxu0 0.0
    %403 = vmatpush1.msra.mxu0 0.0
    %404 = vmatprep.subr.mxu0 0.0
    %405 = vmatpush1.msra.mxu0 0.0
    %406 = vmatprep.mubr.f32.mxu0 0.0
    %v407 = vand.u32 %v65, 4294901760
    %v408 = vsub.f32 %v65, %v407
    %v409 = vand.u32 %v408, 4294901760
    %410 = vmatmul.mubr.f32.gmra.mrb[0].mxu0 %v409
    %v411 = vpop.f32.mrb[0].mxu0
    %v412 = vadd.f32 %v329, %v411
    %v413 = vpop.f32.mrb[0].mxu0
    %414 = vmatprep.mubr.f32.mxu0 0.0
    %v415 = vand.u32 %v68, 4294901760
    %v416 = vsub.f32 %v68, %v415
    %v417 = vand.u32 %v416, 4294901760
    %418 = vmatmul.mubr.f32.gmra.mrb[0].mxu0 %v417
    %v419 = vpop.f32.mrb[0].mxu0
    %v420 = vadd.f32 %v336, %v419
    %v421 = vpop.f32.mrb[0].mxu0
    %422 = vdwg.mxu0
    %423 = vmatprep.subr.mxu0 0.0
    %v424 = vand.u32 %v58, 4294901760
    %v425 = vsub.f32 %v58, %v424
    %v426 = vand.u32 %v425, 4294901760
    %427 = vmatpush1.msra.mxu0 %v426
    %428 = vmatprep.subr.mxu0 0.0
    %v429 = vand.u32 %v59, 4294901760
    %v430 = vsub.f32 %v59, %v429
    %v431 = vand.u32 %v430, 4294901760
    %432 = vmatpush1.msra.mxu0 %v431
    %433 = vmatprep.subr.mxu0 0.0
    %v434 = vand.u32 %v72, 4294901760
    %v435 = vsub.f32 %v72, %v434
    %v436 = vand.u32 %v435, 4294901760
    %437 = vmatpush1.msra.mxu0 %v436
    %438 = vmatprep.subr.mxu0 0.0
    %439 = vmatpush1.msra.mxu0 0.0
    %440 = vmatprep.subr.mxu0 0.0
    %441 = vmatpush1.msra.mxu0 0.0
    %442 = vmatprep.subr.mxu0 0.0
    %443 = vmatpush1.msra.mxu0 0.0
    %444 = vmatprep.subr.mxu0 0.0
    %445 = vmatpush1.msra.mxu0 0.0
    %446 = vmatprep.subr.mxu0 0.0
    %447 = vmatpush1.msra.mxu0 0.0
    %448 = vmatprep.subr.mxu0 0.0
    %449 = vmatpush1.msra.mxu0 0.0
    %450 = vmatprep.subr.mxu0 0.0
    %451 = vmatpush1.msra.mxu0 0.0
    %452 = vmatprep.subr.mxu0 0.0
    %453 = vmatpush1.msra.mxu0 0.0
    %454 = vmatprep.subr.mxu0 0.0
    %455 = vmatpush1.msra.mxu0 0.0
    %456 = vmatprep.subr.mxu0 0.0
    %457 = vmatpush1.msra.mxu0 0.0
    %458 = vmatprep.subr.mxu0 0.0
    %459 = vmatpush1.msra.mxu0 0.0
    %460 = vmatprep.subr.mxu0 0.0
    %461 = vmatpush1.msra.mxu0 0.0
    %462 = vmatprep.subr.mxu0 0.0
    %463 = vmatpush1.msra.mxu0 0.0
    %464 = vmatprep.subr.mxu0 0.0
    %465 = vmatpush1.msra.mxu0 0.0
    %466 = vmatprep.subr.mxu0 0.0
    %467 = vmatpush1.msra.mxu0 0.0
    %468 = vmatprep.subr.mxu0 0.0
    %469 = vmatpush1.msra.mxu0 0.0
    %470 = vmatprep.subr.mxu0 0.0
    %471 = vmatpush1.msra.mxu0 0.0
    %472 = vmatprep.subr.mxu0 0.0
    %473 = vmatpush1.msra.mxu0 0.0
    %474 = vmatprep.subr.mxu0 0.0
    %475 = vmatpush1.msra.mxu0 0.0
    %476 = vmatprep.subr.mxu0 0.0
    %477 = vmatpush1.msra.mxu0 0.0
    %478 = vmatprep.subr.mxu0 0.0
    %479 = vmatpush1.msra.mxu0 0.0
    %480 = vmatprep.subr.mxu0 0.0
    %481 = vmatpush1.msra.mxu0 0.0
    %482 = vmatprep.subr.mxu0 0.0
    %483 = vmatpush1.msra.mxu0 0.0
    %484 = vmatprep.subr.mxu0 0.0
    %485 = vmatpush1.msra.mxu0 0.0
    %486 = vmatprep.subr.mxu0 0.0
    %487 = vmatpush1.msra.mxu0 0.0
    %488 = vmatprep.subr.mxu0 0.0
    %489 = vmatpush1.msra.mxu0 0.0
    %490 = vmatprep.subr.mxu0 0.0
    %491 = vmatpush1.msra.mxu0 0.0
    %492 = vmatprep.subr.mxu0 0.0
    %493 = vmatpush1.msra.mxu0 0.0
    %494 = vmatprep.subr.mxu0 0.0
    %495 = vmatpush1.msra.mxu0 0.0
    %496 = vmatprep.mubr.f32.mxu0 0.0
    %v497 = vand.u32 %v65, 4294901760
    %498 = vmatmul.mubr.f32.gmra.mrb[0].mxu0 %v497
    %v499 = vpop.f32.mrb[0].mxu0
    %v500 = vadd.f32 %v412, %v499
    %v501 = vpop.f32.mrb[0].mxu0
    %502 = vmatprep.mubr.f32.mxu0 0.0
    %v503 = vand.u32 %v68, 4294901760
    %504 = vmatmul.mubr.f32.gmra.mrb[0].mxu0 %v503
    %v505 = vpop.f32.mrb[0].mxu0
    %v506 = vadd.f32 %v420, %v505
    %v507 = vpop.f32.mrb[0].mxu0
    %508 = vdwg.mxu0
    %509 = vmatprep.subr.mxu0 0.0
    %v510 = vand.u32 %v58, 4294901760
    %511 = vmatpush1.msra.mxu0 %v510
    %512 = vmatprep.subr.mxu0 0.0
    %v513 = vand.u32 %v59, 4294901760
    %514 = vmatpush1.msra.mxu0 %v513
    %515 = vmatprep.subr.mxu0 0.0
    %v516 = vand.u32 %v72, 4294901760
    %517 = vmatpush1.msra.mxu0 %v516
    %518 = vmatprep.subr.mxu0 0.0
    %519 = vmatpush1.msra.mxu0 0.0
    %520 = vmatprep.subr.mxu0 0.0
    %521 = vmatpush1.msra.mxu0 0.0
    %522 = vmatprep.subr.mxu0 0.0
    %523 = vmatpush1.msra.mxu0 0.0
    %524 = vmatprep.subr.mxu0 0.0
    %525 = vmatpush1.msra.mxu0 0.0
    %526 = vmatprep.subr.mxu0 0.0
    %527 = vmatpush1.msra.mxu0 0.0
    %528 = vmatprep.subr.mxu0 0.0
    %529 = vmatpush1.msra.mxu0 0.0
    %530 = vmatprep.subr.mxu0 0.0
    %531 = vmatpush1.msra.mxu0 0.0
    %532 = vmatprep.subr.mxu0 0.0
    %533 = vmatpush1.msra.mxu0 0.0
    %534 = vmatprep.subr.mxu0 0.0
    %535 = vmatpush1.msra.mxu0 0.0
    %536 = vmatprep.subr.mxu0 0.0
    %537 = vmatpush1.msra.mxu0 0.0
    %538 = vmatprep.subr.mxu0 0.0
    %539 = vmatpush1.msra.mxu0 0.0
    %540 = vmatprep.subr.mxu0 0.0
    %541 = vmatpush1.msra.mxu0 0.0
    %542 = vmatprep.subr.mxu0 0.0
    %543 = vmatpush1.msra.mxu0 0.0
    %544 = vmatprep.subr.mxu0 0.0
    %545 = vmatpush1.msra.mxu0 0.0
    %546 = vmatprep.subr.mxu0 0.0
    %547 = vmatpush1.msra.mxu0 0.0
    %548 = vmatprep.subr.mxu0 0.0
    %549 = vmatpush1.msra.mxu0 0.0
    %550 = vmatprep.subr.mxu0 0.0
    %551 = vmatpush1.msra.mxu0 0.0
    %552 = vmatprep.subr.mxu0 0.0
    %553 = vmatpush1.msra.mxu0 0.0
    %554 = vmatprep.subr.mxu0 0.0
    %555 = vmatpush1.msra.mxu0 0.0
    %556 = vmatprep.subr.mxu0 0.0
    %557 = vmatpush1.msra.mxu0 0.0
    %558 = vmatprep.subr.mxu0 0.0
    %559 = vmatpush1.msra.mxu0 0.0
    %560 = vmatprep.subr.mxu0 0.0
    %561 = vmatpush1.msra.mxu0 0.0
    %562 = vmatprep.subr.mxu0 0.0
    %563 = vmatpush1.msra.mxu0 0.0
    %564 = vmatprep.subr.mxu0 0.0
    %565 = vmatpush1.msra.mxu0 0.0
    %566 = vmatprep.subr.mxu0 0.0
    %567 = vmatpush1.msra.mxu0 0.0
    %568 = vmatprep.subr.mxu0 0.0
    %569 = vmatpush1.msra.mxu0 0.0
    %570 = vmatprep.subr.mxu0 0.0
    %571 = vmatpush1.msra.mxu0 0.0
    %572 = vmatprep.subr.mxu0 0.0
    %573 = vmatpush1.msra.mxu0 0.0
    %574 = vmatprep.subr.mxu0 0.0
    %575 = vmatpush1.msra.mxu0 0.0
    %576 = vmatprep.mubr.f32.mxu0 0.0
    %v577 = vand.u32 %v65, 4294901760
    %578 = vmatmul.mubr.f32.gmra.mrb[0].mxu0 %v577
    %v579 = vpop.f32.mrb[0].mxu0
    %v580 = vadd.f32 %v500, %v579
    %v581 = vpop.f32.mrb[0].mxu0
    %582 = vmatprep.mubr.f32.mxu0 0.0
    %v583 = vand.u32 %v68, 4294901760
    %584 = vmatmul.mubr.f32.gmra.mrb[0].mxu0 %v583
    %v585 = vpop.f32.mrb[0].mxu0
    %v586 = vadd.f32 %v506, %v585
    %v587 = vpop.f32.mrb[0].mxu0
    %588 = vdwg.mxu0
    %vm589 = vcmask 146432
    %590 = vst.msk [vmem:[#allocation8] sm:$0xff] %vm589, %v580
    %591 = vst.msk [vmem:[#allocation8 + $0x8] sm:$0xff] %vm589, %v586
    // Predicated region
    $region26: #{_linear_add.1} parent=1 // pred_check
      _
    $region27: #{_linear_add.1} parent=1 // pred_check_branch
      %593 = sbr.rel (0) target = $region29
    $region28: #{_linear_add.1} parent=1 // pred_region
      %s595 = ssub.s32 256, 256
      %596 = vsyncadd [#allocation4], %s595
      %s597 = sshll.u32 [#allocation8], 4
      %s598 = int_to_ptr.vmem [resolvable:$true] %s597
      %603 = dma.vmem_to_hbm [thread:$0]  %s598, 256, %s3, [#allocation4], 128, 128, 8
    $region29: #{_linear_add.1} parent=1 // pred_fallthru
      _
    // Predicated region
    $region30: #{_linear_add.1} parent=1 // pred_check
      _
    $region31: #{_linear_add.1} parent=1 // pred_check_branch
      %605 = sbr.rel (0) target = $region33
    $region32: #{_linear_add.1} parent=1 // pred_region
      %606 = dma.done [#allocation4], 256
    $region33: #{_linear_add.1} parent=1 // pred_fallthru
      _
    %607 = vsyncpa [#allocation3], 1
    %608 = vsyncpa [#allocation6], 1
    %609 = vsyncpa [#allocation4], 1

</llo_original>
